<compile_context>
chip_gen: v7x
topology: tpu7x:2x2x1
jax: 0.10.0
libtpu: 0.0.40
codegen_flags: <defaults>
</compile_context>

<pallas_src>
import math
import functools

import jax
import jax.numpy as jnp
from jax.experimental import pallas as pl
from jax.experimental.pallas import tpu as pltpu


# ----------------------------------------------------------------------------
# Kernel 1: 1x1 conv (input projection) in NCHW == channel matmul + bias
# ----------------------------------------------------------------------------
def _proj_kernel(x_ref, wt_ref, b_ref, o_ref, *, precision):
    # x_ref : [1, C, T]   (T = H*W lane tile)
    # wt_ref: [N, C]      (N = 2*pos_feats) weight, pre-transposed
    # b_ref : [N, 1]
    # o_ref : [1, N, T]
    acc = jnp.dot(wt_ref[...], x_ref[0],
                  preferred_element_type=jnp.float32, precision=precision)
    o_ref[0] = (acc + b_ref[...]).astype(o_ref.dtype)


def _choose_hw_tile(hw, c, n, in_itemsize, out_itemsize, budget_bytes=12 << 20):
    """Lane tile (multiple of 128, or the full HW extent) for the projection.

    The budget covers the *pipelined* working set: double-buffered input block
    (2*C*t), double-buffered output block (2*N*t) and the resident weight/bias
    blocks.  12 MiB keeps us under v5e's 16 MiB scoped-VMEM default and leaves
    ample headroom on v7x (32 MiB scoped default of 64 MiB physical).
    A cdiv grid with a masked last block handles non-multiple H*W.
    """
    fixed = 2 * (c * n + n) * 4                        # weight + bias buffers
    per_col = 2 * (c * in_itemsize + n * out_itemsize)  # 2x in + 2x out per col
    cap = ((budget_bytes - fixed) // max(per_col, 1)) // 128 * 128
    cap = max(128, min(2048, cap))
    if hw <= 256:
        return hw                                      # tiny map: one full block
    if hw <= cap:
        # Fits in a single block, but split anyway so the DMA/compute pipeline
        # has >=2 steps along HW (matters when B is 1 or 2).
        return max(128, pl.cdiv(pl.cdiv(hw, 2), 128) * 128)
    return cap


def input_projection_nchw(x_bchw, w, b, *, out_dtype=jnp.float32,
                          io_dtype=None, precision=None):
    """1x1 conv: x [B,C,H,W] -> [B,N,H,W] with N = w.shape[1]. No transposes.

    io_dtype: optionally run the (HBM-bound) matmul with bf16 input/weight and
      bf16 output — accumulation stays f32 on the MXU, HBM traffic ~halves.
      Default None keeps f32 to match the PyTorch Conv2d.
    precision: pass jax.lax.Precision.HIGHEST for strict f32 MXU parity; the
      kernel is memory-bound so the extra passes are free.
    """
    B, C, H, W = x_bchw.shape
    HW = H * W
    N = w.shape[1]

    x3 = x_bchw.reshape(B, C, HW)            # free reshape (trailing-dim merge)
    wt = jnp.transpose(w)                    # [N, C] (tiny, one-time)
    if io_dtype is not None:
        x3 = x3.astype(io_dtype)
        wt = wt.astype(io_dtype)
        out_dtype = io_dtype
    b2 = b.reshape(N, 1).astype(jnp.float32)

    t_hw = _choose_hw_tile(HW, C, N, x3.dtype.itemsize,
                           jnp.dtype(out_dtype).itemsize)
    n_t = pl.cdiv(HW, t_hw)

    out3 = pl.pallas_call(
        functools.partial(_proj_kernel, precision=precision),
        out_shape=jax.ShapeDtypeStruct((B, N, HW), out_dtype),
        grid=(B, n_t),
        in_specs=[
            pl.BlockSpec((1, C, t_hw), lambda bi, j: (bi, 0, j)),
            pl.BlockSpec((N, C), lambda bi, j: (0, 0)),
            pl.BlockSpec((N, 1), lambda bi, j: (0, 0)),
        ],
        out_specs=pl.BlockSpec((1, N, t_hw), lambda bi, j: (bi, 0, j)),
        compiler_params=pltpu.CompilerParams(
            dimension_semantics=("parallel", "parallel")),
    )(x3, wt, b2)
    return out3.reshape(B, N, H, W)          # free reshape back to NCHW


# ----------------------------------------------------------------------------
# Kernel 2a: normalized y/x cumsum planes of the not-mask
# ----------------------------------------------------------------------------
def _cumsum_norm_kernel(nm_ref, emb_ref, *, scale):
    # nm_ref : [1, H, W]     f32 not-mask (1.0 where NOT padding)
    # emb_ref: [1, 2, H, W]  plane 0 = normalized y_embed, plane 1 = x_embed
    nm = nm_ref[0]
    H, W = nm.shape
    eps = 1e-6

    # Triangular cumsum operators built in-register (no HBM inputs / DMA).
    r_h = jax.lax.broadcasted_iota(jnp.int32, (H, H), 0)
    c_h = jax.lax.broadcasted_iota(jnp.int32, (H, H), 1)
    tril_h = (r_h >= c_h).astype(jnp.float32)
    r_w = jax.lax.broadcasted_iota(jnp.int32, (W, W), 0)
    c_w = jax.lax.broadcasted_iota(jnp.int32, (W, W), 1)
    triu_w = (r_w <= c_w).astype(jnp.float32)

    # cumsum via MXU matmuls; exact for 0/1 inputs with f32 accumulation.
    y_embed = jnp.dot(tril_h, nm, preferred_element_type=jnp.float32)
    x_embed = jnp.dot(nm, triu_w, preferred_element_type=jnp.float32)
    emb_ref[0, 0] = y_embed / (y_embed[H - 1:H, :] + eps) * scale
    emb_ref[0, 1] = x_embed / (x_embed[:, W - 1:W] + eps) * scale


# ----------------------------------------------------------------------------
# Kernel 2b: lane-dense sin/cos channel emission
# ----------------------------------------------------------------------------
def _sincos_kernel(emb_ref, pos_ref, *, P, temperature):
    # emb_ref: [1, 1, HW]  one normalized embed row (y or x), HW on the lanes
    # pos_ref: [1, P, HW]  P sin/cos channels for that row (lane-dense stores)
    emb = emb_ref[0]                                   # (1, HW)
    ang = None
    # dim_t[2k] == dim_t[2k+1] -> compute the angle once per (sin, cos) pair;
    # the inverse-dim_t factors are trace-time Python constants (no VPU cost).
    # TODO(synk): for very large P (>=64) switch to lax.fori_loop over pairs
    # with an SMEM inv table to bound kernel body size / compile time.
    for p in range(P):
        if p % 2 == 0:
            inv = float(temperature) ** (-2.0 * (p // 2) / float(P))
            ang = emb * inv
            pos_ref[0, pl.ds(p, 1)] = jnp.sin(ang)
        else:
            pos_ref[0, pl.ds(p, 1)] = jnp.cos(ang)


def position_embedding_sine_nchw(not_mask_f32, pos_feats, temperature):
    """PositionEmbeddingSine(normalize=True) -> [B, 2P, H, W] float32."""
    B, H, W = not_mask_f32.shape
    P = pos_feats
    HW = H * W
    scale = 2.0 * math.pi

    # Stage 1: normalized cumsum planes, one grid step per batch element.
    embeds = pl.pallas_call(
        functools.partial(_cumsum_norm_kernel, scale=scale),
        out_shape=jax.ShapeDtypeStruct((B, 2, H, W), jnp.float32),
        grid=(B,),
        in_specs=[pl.BlockSpec((1, H, W), lambda b: (b, 0, 0))],
        out_specs=pl.BlockSpec((1, 2, H, W), lambda b: (b, 0, 0, 0)),
        compiler_params=pltpu.CompilerParams(dimension_semantics=("parallel",)),
    )(not_mask_f32)

    # Free HBM reshape: (B, 2, H, W) -> (2B, 1, HW); row r = 2*b + g with
    # g==0 the y plane, g==1 the x plane.
    embeds_flat = embeds.reshape(2 * B, 1, HW)

    # Stage 2: sin/cos channel emission.  2B independent 'parallel' grid steps
    # (>=2 even at B==1 -> both v7x TensorCores busy); every EUP op and every
    # store operates on [*, HW] with HW on the lane axis (lane-dense).
    pos = pl.pallas_call(
        functools.partial(_sincos_kernel, P=P, temperature=float(temperature)),
        out_shape=jax.ShapeDtypeStruct((2 * B, P, HW), jnp.float32),
        grid=(2 * B,),
        in_specs=[pl.BlockSpec((1, 1, HW), lambda r: (r, 0, 0))],
        out_specs=pl.BlockSpec((1, P, HW), lambda r: (r, 0, 0)),
        compiler_params=pltpu.CompilerParams(dimension_semantics=("parallel",)),
    )(embeds_flat)

    # Free reshapes: (2B, P, HW) -> (B, 2P, H, W); channel c = g*P + p, i.e.
    # y channels [0, P) then x channels [P, 2P) — PyTorch's cat order.
    return pos.reshape(B, 2 * P, H, W)


# ----------------------------------------------------------------------------
# Full forward (glue in plain JAX around the Pallas hot paths)
# ----------------------------------------------------------------------------
def image_encoder_forward(backbone_feat, img_mask, proj_w, proj_b,
                          pos_feats=8, pos_temperature=10000.0,
                          proj_out_dtype=jnp.float32, proj_io_dtype=None,
                          proj_precision=None):
    """
    backbone_feat : [B, C, H, W] float32   (NCHW, output of the backbone)
    img_mask      : [B, Hi, Wi]  bool      (True = padding)
    proj_w        : [C, 2*pos_feats]       (1x1 conv weight, channel-matmul form)
    proj_b        : [2*pos_feats]
    Returns (img_feature [B,2P,H,W], reduced_mask [B,H,W] bool, pos [B,2P,H,W])
    """
    B, C, H, W = backbone_feat.shape
    Hi, Wi = img_mask.shape[1], img_mask.shape[2]

    # --- 1x1 conv projection (Pallas matmul, NCHW, lane axis = H*W tile) ---
    img_feature = input_projection_nchw(
        backbone_feat, proj_w, proj_b, out_dtype=proj_out_dtype,
        io_dtype=proj_io_dtype, precision=proj_precision)

    # --- mask reductor: nearest-neighbor downsample to feature resolution ---
    # Pure gather/indexing; left as JAX glue (no Pallas win).
    idx_h = jnp.floor(jnp.arange(H) * (Hi / H)).astype(jnp.int32)
    idx_w = jnp.floor(jnp.arange(W) * (Wi / W)).astype(jnp.int32)
    reduced_mask = img_mask[:, idx_h, :][:, :, idx_w]          # [B, H, W] bool

    # --- 2D sine position embedding (Pallas kernels, NCHW output) ---
    not_mask = (~reduced_mask).astype(jnp.float32)
    pos = position_embedding_sine_nchw(not_mask, pos_feats, pos_temperature)

    return img_feature, reduced_mask, pos


# ----------------------------------------------------------------------------
# Pure-JAX reference (for correctness check)
# ----------------------------------------------------------------------------
def reference_forward(backbone_feat, img_mask, proj_w, proj_b, pos_feats, temperature):
    B, C, H, W = backbone_feat.shape
    Hi, Wi = img_mask.shape[1], img_mask.shape[2]
    proj = jnp.einsum('bchw,cd->bdhw', backbone_feat, proj_w) + proj_b[None, :, None, None]

    idx_h = jnp.floor(jnp.arange(H) * (Hi / H)).astype(jnp.int32)
    idx_w = jnp.floor(jnp.arange(W) * (Wi / W)).astype(jnp.int32)
    rmask = img_mask[:, idx_h, :][:, :, idx_w]

    not_mask = (~rmask).astype(jnp.float32)
    y_embed = jnp.cumsum(not_mask, axis=1)
    x_embed = jnp.cumsum(not_mask, axis=2)
    eps = 1e-6
    scale = 2.0 * math.pi
    y_embed = y_embed / (y_embed[:, -1:, :] + eps) * scale
    x_embed = x_embed / (x_embed[:, :, -1:] + eps) * scale
    i = jnp.arange(pos_feats, dtype=jnp.float32)
    dim_t = temperature ** (2.0 * jnp.floor(i / 2.0) / pos_feats)
    px = x_embed[..., None] / dim_t
    py = y_embed[..., None] / dim_t
    even = (jnp.arange(pos_feats) % 2) == 0
    px = jnp.where(even, jnp.sin(px), jnp.cos(px))
    py = jnp.where(even, jnp.sin(py), jnp.cos(py))
    pos = jnp.concatenate([py, px], axis=-1).transpose(0, 3, 1, 2)
    return proj, rmask, pos


if __name__ == "__main__":
    # Small, deterministic configuration consistent with the module:
    # backbone_feats=32, pos_feats=8 -> input_proj: Conv2d(32, 16, 1)
    B, C, H, W = 2, 32, 8, 8          # backbone feature map (NCHW)
    Hi, Wi = 16, 16                   # original image-mask resolution
    POS_FEATS = 8
    TEMPERATURE = 10000.0

    key = jax.random.PRNGKey(0)
    k_feat, k_w, k_b = jax.random.split(key, 3)

    backbone_feat = jax.random.normal(k_feat, (B, C, H, W), dtype=jnp.float32)
    # padding mask: True on the right/bottom border (deterministic pattern)
    col = jnp.arange(Wi)[None, None, :]
    row = jnp.arange(Hi)[None, :, None]
    img_mask = jnp.broadcast_to((col >= 12) | (row >= 14), (B, Hi, Wi))

    # Conv2d(C, 2*POS_FEATS, kernel_size=1) parameters, deterministic init.
    proj_w = jax.random.normal(k_w, (C, 2 * POS_FEATS), dtype=jnp.float32) * 0.05
    proj_b = jax.random.normal(k_b, (2 * POS_FEATS,), dtype=jnp.float32) * 0.05

    feat_out, rmask_out, pos_out = image_encoder_forward(
        backbone_feat, img_mask, proj_w, proj_b,
        pos_feats=POS_FEATS, pos_temperature=TEMPERATURE)
    jax.block_until_ready((feat_out, rmask_out, pos_out))

    # sanity check against pure-JAX reference
    ref_feat, ref_mask, ref_pos = reference_forward(
        backbone_feat, img_mask, proj_w, proj_b, POS_FEATS, TEMPERATURE)
    assert feat_out.shape == (B, 2 * POS_FEATS, H, W)
    assert rmask_out.shape == (B, H, W) and rmask_out.dtype == jnp.bool_
    assert pos_out.shape == (B, 2 * POS_FEATS, H, W)
    assert jnp.allclose(feat_out, ref_feat, atol=1e-4)
    assert bool(jnp.all(rmask_out == ref_mask))
    assert jnp.allclose(pos_out, ref_pos, atol=1e-4)

    print("KERNEL_OK")
</pallas_src>

<mosaic_0001>
module attributes {stable_mosaic.version = 11 : i64} {
  func.func @_proj_kernel(%arg0: i32, %arg1: i32, %arg2: memref<1x32x64xf32, #tpu.memory_space<vmem>>, %arg3: memref<16x32xf32, #tpu.memory_space<vmem>>, %arg4: memref<16x1xf32, #tpu.memory_space<vmem>>, %arg5: memref<1x16x64xf32, #tpu.memory_space<vmem>>) attributes {dimension_semantics = [#tpu.dimension_semantics<parallel>, #tpu.dimension_semantics<parallel>], iteration_bounds = array<i64: 2, 1>, scalar_prefetch = 0 : i64, scratch_operands = 0 : i64, tpu.core_type = #tpu.core_type<tc>, window_params = [{transform_indices = @transform_0, window_bounds = array<i64: 1, 32, 64>}, {pipeline_mode = #tpu.pipeline_mode<synchronous>, transform_indices = @transform_1, window_bounds = array<i64: 16, 32>}, {pipeline_mode = #tpu.pipeline_mode<synchronous>, transform_indices = @transform_2, window_bounds = array<i64: 16, 1>}, {transform_indices = @transform_3, window_bounds = array<i64: 1, 16, 64>}]} {
    %c0 = arith.constant 0 : index
    %c0_0 = arith.constant 0 : index
    %0 = vector.load %arg3[%c0, %c0_0] : memref<16x32xf32, #tpu.memory_space<vmem>>, vector<16x32xf32>
    %c0_1 = arith.constant 0 : index
    %c0_2 = arith.constant 0 : index
    %c0_3 = arith.constant 0 : index
    %1 = vector.load %arg2[%c0_1, %c0_2, %c0_3] : memref<1x32x64xf32, #tpu.memory_space<vmem>>, vector<1x32x64xf32>
    %2 = vector.shape_cast %1 : vector<1x32x64xf32> to vector<32x64xf32>
    %cst = arith.constant dense<0.000000e+00> : vector<16x64xf32>
    %3 = tpu.matmul %0, %2, %cst {dimension_numbers = #tpu.dot_dimension_numbers<[1], [0], [0], [1], [0, 0, 1, 1], [], []>} : vector<16x32xf32>, vector<32x64xf32>, vector<16x64xf32> -> vector<16x64xf32>
    %c0_4 = arith.constant 0 : index
    %c0_5 = arith.constant 0 : index
    %4 = vector.load %arg4[%c0_4, %c0_5] : memref<16x1xf32, #tpu.memory_space<vmem>>, vector<16x1xf32>
    %5 = vector.broadcast %4 : vector<16x1xf32> to vector<16x64xf32>
    %6 = arith.addf %3, %5 : vector<16x64xf32>
    %c0_6 = arith.constant 0 : index
    %c0_7 = arith.constant 0 : index
    %c0_8 = arith.constant 0 : index
    %7 = vector.load %arg5[%c0_6, %c0_7, %c0_8] : memref<1x16x64xf32, #tpu.memory_space<vmem>>, vector<1x16x64xf32>
    %8 = vector.shape_cast %7 : vector<1x16x64xf32> to vector<16x64xf32>
    %9 = vector.shape_cast %6 : vector<16x64xf32> to vector<1x16x64xf32>
    tpu.vector_store %arg5[%c0_6, %c0_7, %c0_8], %9 {strides = array<i32>} : memref<1x16x64xf32, #tpu.memory_space<vmem>>, vector<1x16x64xf32>,
    return
  }
  func.func @transform_0(%arg0: i32, %arg1: i32) -> (i32, i32, i32) {
    %c0_i32 = arith.constant 0 : i32
    %c0_i32_0 = arith.constant 0 : i32
    return %arg0, %c0_i32, %arg1 : i32, i32, i32
  }
  func.func @transform_1(%arg0: i32, %arg1: i32) -> (i32, i32) {
    %c0_i32 = arith.constant 0 : i32
    %c0_i32_0 = arith.constant 0 : i32
    %c0_i32_1 = arith.constant 0 : i32
    return %c0_i32, %c0_i32_0 : i32, i32
  }
  func.func @transform_2(%arg0: i32, %arg1: i32) -> (i32, i32) {
    %c0_i32 = arith.constant 0 : i32
    %c0_i32_0 = arith.constant 0 : i32
    %c0_i32_1 = arith.constant 0 : i32
    return %c0_i32, %c0_i32_0 : i32, i32
  }
  func.func @transform_3(%arg0: i32, %arg1: i32) -> (i32, i32, i32) {
    %c0_i32 = arith.constant 0 : i32
    %c0_i32_0 = arith.constant 0 : i32
    return %arg0, %c0_i32, %arg1 : i32, i32, i32
  }
}

</mosaic_0001>

<llo_original>
// kernel: tpu_custom_call.1
$region0: #{tpu_custom_call.1}
  #allocation0 [shape = 'u32[]', space=smem, size = 0x4, offset = 0x4, fixed_abs, tag = 'smem constant byte address 0x4 - core index']
  #allocation1 [shape = 'u32[144,128]{1,0:T(1,128)}', space=vmem, size = 0x12000, scoped, tag = 'internal scratch']
  %s0 = inlined_call_operand.hbm [shape: f32[2,32,64], index: 0, kind: input, shape index: {}]
  %s1 = inlined_call_operand.vmem [shape: f32[16,32], index: 1, kind: input, shape index: {}]
  %s2 = inlined_call_operand.vmem [shape: f32[16,1], index: 2, kind: input, shape index: {}]
  %s3 = inlined_call_operand.hbm [shape: f32[2,16,64], index: 3, kind: output, shape index: {}]
  %s4 = sld [smem:[#allocation0]]
  $region49: #{tpu_custom_call.1} parent=0
    _
  %s6 = ssub.s32 1, %s4
  %s7 = scalar_select 0, %s6, %s4
  $region1: #{tpu_custom_call.1} parent=0
    #allocation2 [shape = 'u8[32768]{0}', space=vmem, size = 0x8000, scoped, tag = 'input window, operand 0']
    #allocation3 [shape = 's32[2]{0}', space=sflag, size = 0x8, scoped, tag = 'scoped memory for tpu_custom_call.1']
    #allocation4 [shape = 's32[2]{0}', space=sflag, size = 0x8, scoped, tag = 'scoped memory for tpu_custom_call.1']
    #allocation5 [shape = 'u8[16384]{0}', space=vmem, size = 0x4000, scoped, tag = 'output window, operand 0']
    %8 = vsyncpa [#allocation3], 0
    %s9 = scalar_lea.sflag [#allocation3], 1
    %10 = vsyncpa %s9, 0
    %11 = vsyncpa [#allocation4], 0
    %s12 = scalar_lea.sflag [#allocation4], 1
    %13 = vsyncpa %s12, 0
    loop: start=0, step=1, limit=4
    $region2: #{tpu_custom_call.1} parent=1 // loop_pre_header
      _
    $region3: #{tpu_custom_call.1} parent=1 // loop_header
      %s15 = sphi 0, %s19
      %p16 = scmp.ge.s32.totalorder %s15, 4
      %s22 = sphi 0, %s34
      %s23 = sphi 0, %s30
      %s24 = sphi 0, %s22
      %s25 = sphi 0, %s23
      %s26 = sphi 0, %s24
      %s27 = sphi 0, %s25
      %s39 = sphi 0, %s41
      %s42 = sphi 0, %s39
      %s43 = sphi 0, %s42
      %s59 = sphi 0, %s43
      %s63 = sphi 0, %s63
      %s65 = sphi 0, %s63
      %s66 = sphi 0, %s65
      %s80 = sphi 0, %s66
      %s84 = sphi 0, %s84
      %s86 = sphi 0, %s84
      %s87 = sphi 0, %s86
      %s101 = sphi 0, %s87
      %s109 = sphi 0, %s111
      %s112 = sphi 0, %s109
      %s113 = sphi 0, %s112
      %s129 = sphi 0, %s113
    $region4: #{tpu_custom_call.1} parent=1 // loop_header_branch
      %18 = sbr.rel (%p16) target = $region8
    $region5: #{tpu_custom_call.1} parent=1 // loop_body
      %s20 = ssub.s32 %s15, 1
      %s21 = ssub.s32 %s15, 2
      %s28 = sadd.s32 1, %s23
      %p29 = scmp.ge.s32.totalorder %s28, 1
      %s30 = scalar_select %p29, 0, %s28
      %s31 = sadd.s32 1, %s22
      %s32 = scalar_select %p29, %s31, %s22
      %p33 = scmp.ge.s32.totalorder %s32, 2
      %s34 = scalar_select %p33, 0, %s32
      %s35 = ssub.s32 %s22, %s34
      %s36 = ssub.s32 %s23, %s30
      %s37 = sor.u32 %s35, %s36
      %p38 = scmp.eq.s32.totalorder %s37, 0
      %s40 = sadd.s32 %s39, 1
      %s41 = scalar_select %p38, %s39, %s40
      %p44 = pneg %p38
      %p45 = scmp.eq.s32.totalorder %s15, 1
      %p46 = por %p44, %p45
      %p47 = scmp.ne.s32.totalorder %s39, %s42
      %p48 = scmp.eq.s32.totalorder %s15, 0
      %p49 = por %p47, %p48
      %p50 = scmp.ne.s32.totalorder %s39, %s42
      %p51 = scmp.eq.s32.totalorder %s20, 1
      %p52 = por %p50, %p51
      %p53 = scmp.ne.s32.totalorder %s42, %s43
      %p54 = scmp.eq.s32.totalorder %s20, 0
      %p55 = por %p53, %p54
      %p56 = scmp.ne.s32.totalorder %s42, %s43
      %p57 = scmp.eq.s32.totalorder %s21, 1
      %p58 = por %p56, %p57
      %p60 = scmp.ne.s32.totalorder %s43, %s59
      %p61 = scmp.eq.s32.totalorder %s21, 0
      %p62 = por %p60, %p61
      %s64 = sadd.s32 %s63, 1
      %p67 = scmp.eq.s32.totalorder %s15, 1
      %p68 = scmp.ne.s32.totalorder %s63, %s65
      %p69 = scmp.eq.s32.totalorder %s15, 0
      %p70 = por %p68, %p69
      %p71 = scmp.ne.s32.totalorder %s63, %s65
      %p72 = scmp.eq.s32.totalorder %s20, 1
      %p73 = por %p71, %p72
      %p74 = scmp.ne.s32.totalorder %s65, %s66
      %p75 = scmp.eq.s32.totalorder %s20, 0
      %p76 = por %p74, %p75
      %p77 = scmp.ne.s32.totalorder %s65, %s66
      %p78 = scmp.eq.s32.totalorder %s21, 1
      %p79 = por %p77, %p78
      %p81 = scmp.ne.s32.totalorder %s66, %s80
      %p82 = scmp.eq.s32.totalorder %s21, 0
      %p83 = por %p81, %p82
      %s85 = sadd.s32 %s84, 1
      %p88 = scmp.eq.s32.totalorder %s15, 1
      %p89 = scmp.ne.s32.totalorder %s84, %s86
      %p90 = scmp.eq.s32.totalorder %s15, 0
      %p91 = por %p89, %p90
      %p92 = scmp.ne.s32.totalorder %s84, %s86
      %p93 = scmp.eq.s32.totalorder %s20, 1
      %p94 = por %p92, %p93
      %p95 = scmp.ne.s32.totalorder %s86, %s87
      %p96 = scmp.eq.s32.totalorder %s20, 0
      %p97 = por %p95, %p96
      %p98 = scmp.ne.s32.totalorder %s86, %s87
      %p99 = scmp.eq.s32.totalorder %s21, 1
      %p100 = por %p98, %p99
      %p102 = scmp.ne.s32.totalorder %s87, %s101
      %p103 = scmp.eq.s32.totalorder %s21, 0
      %p104 = por %p102, %p103
      %s105 = ssub.s32 %s22, %s34
      %s106 = ssub.s32 %s23, %s30
      %s107 = sor.u32 %s105, %s106
      %p108 = scmp.eq.s32.totalorder %s107, 0
      %s110 = sadd.s32 %s109, 1
      %s111 = scalar_select %p108, %s109, %s110
      %p114 = pneg %p108
      %p115 = scmp.eq.s32.totalorder %s15, 1
      %p116 = por %p114, %p115
      %p117 = scmp.ne.s32.totalorder %s109, %s112
      %p118 = scmp.eq.s32.totalorder %s15, 0
      %p119 = por %p117, %p118
      %p120 = scmp.ne.s32.totalorder %s109, %s112
      %p121 = scmp.eq.s32.totalorder %s20, 1
      %p122 = por %p120, %p121
      %p123 = scmp.ne.s32.totalorder %s112, %s113
      %p124 = scmp.eq.s32.totalorder %s20, 0
      %p125 = por %p123, %p124
      %p126 = scmp.ne.s32.totalorder %s112, %s113
      %p127 = scmp.eq.s32.totalorder %s21, 1
      %p128 = por %p126, %p127
      %p130 = scmp.ne.s32.totalorder %s113, %s129
      %p131 = scmp.eq.s32.totalorder %s21, 0
      %p132 = por %p130, %p131
      %p133 = scmp.le.s32.totalorder 1, %s15
      %p134 = scmp.lt.s32.totalorder %s15, 3
      %p135 = pnand %p133, %p134
      %p136 = pneg %p135
      // Predicated region
      $region9: #{tpu_custom_call.1} parent=5 // pred_check
        _
      $region10: #{tpu_custom_call.1} parent=5 // pred_check_branch
        %138 = sbr.rel (%p135) target = $region12
      $region11: #{tpu_custom_call.1} parent=5 // pred_region
        %s139 = ssub.s32 %s15, 1
        // Predicated region
        $region13: #{tpu_custom_call.1} parent=11 // pred_check
          %p140 = pneg %p76
        $region14: #{tpu_custom_call.1} parent=11 // pred_check_branch
          %142 = sbr.rel (%p140) target = $region16
        $region15: #{tpu_custom_call.1} parent=11 // pred_region
          _
        $region16: #{tpu_custom_call.1} parent=11 // pred_fallthru
          _
        // Predicated region
        $region17: #{tpu_custom_call.1} parent=11 // pred_check
          %p143 = pneg %p97
        $region18: #{tpu_custom_call.1} parent=11 // pred_check_branch
          %145 = sbr.rel (%p143) target = $region20
        $region19: #{tpu_custom_call.1} parent=11 // pred_region
          _
        $region20: #{tpu_custom_call.1} parent=11 // pred_fallthru
          _
      $region12: #{tpu_custom_call.1} parent=5 // pred_fallthru
        _
      %p146 = scmp.lt.s32.totalorder %s15, 2
      // Predicated region
      $region21: #{tpu_custom_call.1} parent=5 // pred_check
        %p147 = pneg %p146
      $region22: #{tpu_custom_call.1} parent=5 // pred_check_branch
        %149 = sbr.rel (%p147) target = $region24
      $region23: #{tpu_custom_call.1} parent=5 // pred_region
        // Predicated region
        $region25: #{tpu_custom_call.1} parent=23 // pred_check
          %p150 = pneg %p49
        $region26: #{tpu_custom_call.1} parent=23 // pred_check_branch
          %152 = sbr.rel (%p150) target = $region28
        $region27: #{tpu_custom_call.1} parent=23 // pred_region
          %s153 = sand.u32 %s39, 1
          %s154 = scalar_lea.sflag [#allocation3], %s153
          %s155 = sand.u32 %s39, 1
          %s156 = smul.addr %s155, 32
          %s157 = scalar_lea.vmem [#allocation2], %s156
          %s159 = ssub.s32 512, 512
          %160 = vsyncadd %s154, %s159
          %s161 = smul.addr %s22, 4
          %s162 = sadd.s32 %s23, %s161
          %s163 = smul.addr %s162, 128
          %s164 = scalar_lea.hbm %s0, %s163
          %s165 = sshll.u32 %s157, 4
          %s166 = int_to_ptr.vmem [resolvable:$true] %s165
          %171 = dma.hbm_to_vmem [thread:$0]  %s164, 512, %s166, %s154, 128, 128, 8
        $region28: #{tpu_custom_call.1} parent=23 // pred_fallthru
          _
      $region24: #{tpu_custom_call.1} parent=5 // pred_fallthru
        _
      %p172 = scmp.le.s32.totalorder 1, %s15
      %p173 = scmp.lt.s32.totalorder %s15, 3
      %p174 = pnand %p172, %p173
      %p175 = pneg %p174
      // Predicated region
      $region29: #{tpu_custom_call.1} parent=5 // pred_check
        _
      $region30: #{tpu_custom_call.1} parent=5 // pred_check_branch
        %177 = sbr.rel (%p174) target = $region32
      $region31: #{tpu_custom_call.1} parent=5 // pred_region
        %s178 = ssub.s32 %s15, 1
        %s179 = sand.u32 %s42, 1
        %s180 = scalar_lea.sflag [#allocation3], %s179
        %s181 = sand.u32 %s42, 1
        %s182 = smul.addr %s181, 32
        %s183 = scalar_lea.vmem [#allocation2], %s182
        // Predicated region
        $region33: #{tpu_custom_call.1} parent=31 // pred_check
          %p184 = pneg %p55
        $region34: #{tpu_custom_call.1} parent=31 // pred_check_branch
          %186 = sbr.rel (%p184) target = $region36
        $region35: #{tpu_custom_call.1} parent=31 // pred_region
          %187 = dma.done %s180, 512
        $region36: #{tpu_custom_call.1} parent=31 // pred_fallthru
          _
        %s188 = sand.u32 %s42, 1
        %s189 = scalar_lea.sflag [#allocation3], %s188
        %s190 = sand.u32 %s42, 1
        %s191 = smul.addr %s190, 32
        %s192 = scalar_lea.vmem [#allocation2], %s191
        %p193 = pneg %p55
        %p194 = pneg %p52
        %p195 = pneg %p76
        %p196 = pneg %p73
        %p197 = pneg %p97
        %p198 = pneg %p94
        %p199 = pneg %p125
        %p200 = pneg %p122
        %s201 = sand.u32 %s112, 1
        %s202 = scalar_lea.sflag [#allocation4], %s201
        %s203 = sand.u32 %s112, 1
        %s204 = smul.addr %s203, 16
        %s205 = scalar_lea.vmem [#allocation5], %s204
        %v206 = vld [vmem:[%s1] sm:$0xff]
        %v207 = vld [vmem:[%s1 + $0x8] sm:$0xff]
        %v208 = vld [vmem:[%s183] sm:$0xff]
        %v209 = vld [vmem:[%s183 + $0x8] sm:$0xff]
        %v210 = vld [vmem:[%s183 + $0x10] sm:$0xff]
        %v211 = vld [vmem:[%s183 + $0x18] sm:$0xff]
        %v212 = vld [vmem:[%s2] sm:$0xff]
        %v213 = vld [vmem:[%s2 + $0x8] sm:$0xff]
        %215 = vset.pattern.permute.xlu0 0
        %216 = vperm.xlu0 %215, %v212
        %v217 = vpop.permute.xlu0 %216
        %220 = vset.pattern.permute.xlu0 0
        %221 = vperm.xlu0 %220, %v213
        %v222 = vpop.permute.xlu0 %221
        %vm224 = vcmask 261120
        %v226 = vsel %vm224, %v206, 0
        %v229 = vsel %vm224, %v207, 0
        %231 = vmatprep.subr.mxu0 0.0
        %232 = vmatpush1.msra.mxu0 %v208
        %233 = vmatprep.subr.mxu0 0.0
        %234 = vmatpush1.msra.mxu0 %v209
        %235 = vmatprep.subr.mxu0 0.0
        %236 = vmatpush1.msra.mxu0 %v210
        %237 = vmatprep.subr.mxu0 0.0
        %238 = vmatpush1.msra.mxu0 %v211
        %239 = vmatprep.subr.mxu0 0.0
        %240 = vmatpush1.msra.mxu0 0.0
        %241 = vmatprep.subr.mxu0 0.0
        %242 = vmatpush1.msra.mxu0 0.0
        %243 = vmatprep.subr.mxu0 0.0
        %244 = vmatpush1.msra.mxu0 0.0
        %245 = vmatprep.subr.mxu0 0.0
        %246 = vmatpush1.msra.mxu0 0.0
        %247 = vmatprep.subr.mxu0 0.0
        %248 = vmatpush1.msra.mxu0 0.0
        %249 = vmatprep.subr.mxu0 0.0
        %250 = vmatpush1.msra.mxu0 0.0
        %251 = vmatprep.subr.mxu0 0.0
        %252 = vmatpush1.msra.mxu0 0.0
        %253 = vmatprep.subr.mxu0 0.0
        %254 = vmatpush1.msra.mxu0 0.0
        %255 = vmatprep.subr.mxu0 0.0
        %256 = vmatpush1.msra.mxu0 0.0
        %257 = vmatprep.subr.mxu0 0.0
        %258 = vmatpush1.msra.mxu0 0.0
        %259 = vmatprep.subr.mxu0 0.0
        %260 = vmatpush1.msra.mxu0 0.0
        %261 = vmatprep.subr.mxu0 0.0
        %262 = vmatpush1.msra.mxu0 0.0
        %263 = vmatprep.subr.mxu0 0.0
        %264 = vmatpush1.msra.mxu0 0.0
        %265 = vmatprep.subr.mxu0 0.0
        %266 = vmatpush1.msra.mxu0 0.0
        %267 = vmatprep.subr.mxu0 0.0
        %268 = vmatpush1.msra.mxu0 0.0
        %269 = vmatprep.subr.mxu0 0.0
        %270 = vmatpush1.msra.mxu0 0.0
        %271 = vmatprep.subr.mxu0 0.0
        %272 = vmatpush1.msra.mxu0 0.0
        %273 = vmatprep.subr.mxu0 0.0
        %274 = vmatpush1.msra.mxu0 0.0
        %275 = vmatprep.subr.mxu0 0.0
        %276 = vmatpush1.msra.mxu0 0.0
        %277 = vmatprep.subr.mxu0 0.0
        %278 = vmatpush1.msra.mxu0 0.0
        %279 = vmatprep.subr.mxu0 0.0
        %280 = vmatpush1.msra.mxu0 0.0
        %281 = vmatprep.subr.mxu0 0.0
        %282 = vmatpush1.msra.mxu0 0.0
        %283 = vmatprep.subr.mxu0 0.0
        %284 = vmatpush1.msra.mxu0 0.0
        %285 = vmatprep.subr.mxu0 0.0
        %286 = vmatpush1.msra.mxu0 0.0
        %287 = vmatprep.subr.mxu0 0.0
        %288 = vmatpush1.msra.mxu0 0.0
        %289 = vmatprep.subr.mxu0 0.0
        %290 = vmatpush1.msra.mxu0 0.0
        %291 = vmatprep.subr.mxu0 0.0
        %292 = vmatpush1.msra.mxu0 0.0
        %293 = vmatprep.subr.mxu0 0.0
        %294 = vmatpush1.msra.mxu0 0.0
        %295 = vmatprep.mubr.f32.mxu0 0.0
        %296 = vmatmul.mubr.f32.gmra.mrb[0].mxu0 %v226
        %v297 = vpop.f32.mrb[0].mxu0
        %v298 = vadd.f32 %v217, %v297
        %v299 = vpop.f32.mrb[0].mxu0
        %300 = vmatprep.mubr.f32.mxu0 0.0
        %301 = vmatmul.mubr.f32.gmra.mrb[0].mxu0 %v229
        %v302 = vpop.f32.mrb[0].mxu0
        %v303 = vadd.f32 %v222, %v302
        %v304 = vpop.f32.mrb[0].mxu0
        %305 = vdwg.mxu0
        %vm306 = vcmask 523264
        %307 = vst.msk [vmem:[%s205] sm:$0xff] %vm306, %v298
        %308 = vst.msk [vmem:[%s205 + $0x8] sm:$0xff] %vm306, %v303
        %s309 = sand.u32 %s112, 1
        %s310 = scalar_lea.sflag [#allocation4], %s309
        %s311 = sand.u32 %s112, 1
        %s312 = smul.addr %s311, 16
        %s313 = scalar_lea.vmem [#allocation5], %s312
        // Predicated region
        $region37: #{tpu_custom_call.1} parent=31 // pred_check
          %p314 = pneg %p122
        $region38: #{tpu_custom_call.1} parent=31 // pred_check_branch
          %316 = sbr.rel (%p314) target = $region40
        $region39: #{tpu_custom_call.1} parent=31 // pred_region
          %s318 = ssub.s32 256, 256
          %319 = vsyncadd %s310, %s318
          %s320 = smul.addr %s24, 2
          %s321 = sadd.s32 %s25, %s320
          %s322 = smul.addr %s321, 128
          %s323 = scalar_lea.hbm %s3, %s322
          %s324 = sshll.u32 %s313, 4
          %s325 = int_to_ptr.vmem [resolvable:$true] %s324
          %330 = dma.vmem_to_hbm [thread:$0]  %s325, 256, %s323, %s310, 128, 128, 8
        $region40: #{tpu_custom_call.1} parent=31 // pred_fallthru
          _
      $region32: #{tpu_custom_call.1} parent=5 // pred_fallthru
        _
      %p331 = scmp.le.s32.totalorder 2, %s15
      // Predicated region
      $region41: #{tpu_custom_call.1} parent=5 // pred_check
        %p332 = pneg %p331
      $region42: #{tpu_custom_call.1} parent=5 // pred_check_branch
        %334 = sbr.rel (%p332) target = $region44
      $region43: #{tpu_custom_call.1} parent=5 // pred_region
        %s335 = ssub.s32 %s15, 2
        // Predicated region
        $region45: #{tpu_custom_call.1} parent=43 // pred_check
          %p336 = pneg %p128
        $region46: #{tpu_custom_call.1} parent=43 // pred_check_branch
          %338 = sbr.rel (%p336) target = $region48
        $region47: #{tpu_custom_call.1} parent=43 // pred_region
          %s339 = sand.u32 %s113, 1
          %s340 = scalar_lea.sflag [#allocation4], %s339
          %s341 = sand.u32 %s113, 1
          %s342 = smul.addr %s341, 16
          %s343 = scalar_lea.vmem [#allocation5], %s342
          %344 = dma.done %s340, 256
        $region48: #{tpu_custom_call.1} parent=43 // pred_fallthru
          _
      $region44: #{tpu_custom_call.1} parent=5 // pred_fallthru
        _
    $region6: #{tpu_custom_call.1} parent=1 // loop_footer
      %s19 = sadd.s32 1, %s15
    $region7: #{tpu_custom_call.1} parent=1 // loop_footer_branch
      %14 = sbr.rel target = $region3
    $region8: #{tpu_custom_call.1} parent=1 // loop_exit
      _
    %345 = vsyncpa [#allocation3], 1
    %s346 = scalar_lea.sflag [#allocation3], 1
    %347 = vsyncpa %s346, 1
    %348 = vsyncpa [#allocation4], 1
    %s349 = scalar_lea.sflag [#allocation4], 1
    %350 = vsyncpa %s349, 1

</llo_original>
